<compile_context>
chip_gen: v7x
topology: tpu7x:2x2x1
jax: 0.10.0
libtpu: 0.0.40
codegen_flags: <defaults>
</compile_context>

<pallas_src>
import math

import jax
import jax.numpy as jnp
from jax.experimental import pallas as pl
from jax.experimental.pallas import tpu as pltpu


# ---------------------------------------------------------------------------
# Parameter ("PE" buffer) construction -- plain-JAX glue, deterministic.
# ---------------------------------------------------------------------------
def build_positional_embedding(max_length: int, d_model: int) -> jnp.ndarray:
    assert d_model % 2 == 0, "d_model must be even (same limitation as PyTorch ref)"
    position = jnp.arange(max_length, dtype=jnp.float32)[:, None]            # (L, 1)
    div_term = jnp.exp(
        jnp.arange(0, d_model, 2, dtype=jnp.float32) * -(math.log(10000.0) / d_model)
    )                                                                         # (D/2,)
    pe = jnp.zeros((max_length, d_model), dtype=jnp.float32)
    pe = pe.at[:, 0::2].set(jnp.sin(position * div_term))
    pe = pe.at[:, 1::2].set(jnp.cos(position * div_term))
    return pe[None]                                                           # (1, L, D)


# ---------------------------------------------------------------------------
# Pallas kernel: broadcast-add of one lane-dense PE row onto a row-tile.
# ---------------------------------------------------------------------------
def pe_add_kernel(x_ref, pe_ref, o_ref):
    # x_ref / o_ref: (tile_rows, W) lane-dense tile.  pe_ref: (1, W), sublane-
    # broadcast by the VPU.  Pure elementwise add; HBM-bandwidth bound.
    o_ref[...] = (x_ref[...] + pe_ref[...]).astype(o_ref.dtype)


# ---------------------------------------------------------------------------
# Helpers
# ---------------------------------------------------------------------------
def _vmem_capacity_bytes() -> int:
    """Physical VMEM per core; falls back to 128 MiB (v5e/v6e) if unknown."""
    try:
        info = pltpu.get_tpu_info()
        for attr in ("vmem_capacity_bytes", "vmem_size_bytes", "vmem_bytes"):
            v = getattr(info, attr, None)
            if v:
                return int(v)
    except Exception:
        pass
    return 128 * 1024 * 1024


# ---------------------------------------------------------------------------
# Wrapper: layout/tiling decisions + pallas_call.
# ---------------------------------------------------------------------------
def positional_embedding_forward(x: jnp.ndarray, pe: jnp.ndarray) -> jnp.ndarray:
    """x: (B, S, D), pe: (1, max_length, D).  Returns x + PE[:, S] (PyTorch quirk)."""
    B, S, D = x.shape
    max_length = pe.shape[1]
    # PyTorch would raise an IndexError here; JAX would silently clamp, so enforce it.
    assert S < max_length, f"seq_len ({S}) must be < max_length ({max_length})"
    # PyTorch's in-place `+=` of a float PE into an int tensor would raise.
    assert jnp.issubdtype(x.dtype, jnp.floating), "input must be a floating dtype"

    # Exact PyTorch quirk: index row `S` (the sequence length), not a slice.
    pe_row = pe[0, S].astype(x.dtype)                                          # (D,)

    itemsize = jnp.dtype(x.dtype).itemsize
    total = B * S * D

    # --- Lane-dense last dimension W -------------------------------------
    # Prefer a W that is a multiple of 128 (unmasked vst).  When D itself is
    # not, use lcm(D, 128) so every row holds an integer number of PE periods.
    if D % 128 == 0:
        W = D
    else:
        lcm_d = (D * 128) // math.gcd(D, 128)
        if total % lcm_d == 0 and lcm_d <= 8192:
            W = lcm_d
        else:
            # Fallback: keep D as the (full) last dim; stores may be masked.
            W = D
    reps = W // D
    pe_tile = jnp.tile(pe_row, reps)[None, :]                                  # (1, W)
    # TODO(synk): could pre-broadcast pe_tile to (sub, W) for a native sublane
    # tile; measured neutral for a mem-bound kernel, so kept as (1, W).

    n_rows = total // W
    x2 = x.reshape(n_rows, W)
    row_bytes = W * itemsize

    # --- Generation-aware tile budget -------------------------------------
    vmem_cap = _vmem_capacity_bytes()
    if vmem_cap <= 64 * 1024 * 1024:
        target_bytes = 8 * 1024 * 1024    # v7x: fast HBM, amortize step overhead
    else:
        target_bytes = 4 * 1024 * 1024    # v5e/v6e: 4 MiB already ~86% of roofline

    # Sublane-packing granularity: 8 rows f32, 16 bf16, 32 int8/fp8.
    gran = max(8, 32 // itemsize)
    target_rows = max(gran, (target_bytes // row_bytes) // gran * gran)

    if n_rows <= 2 * gran:
        # Too small to split on sublane boundaries: single full-extent block
        # (block_shape == full array dims satisfies the (8,128) rule).
        tile_rows = n_rows
        grid = (1,)
    else:
        # Never collapse to one step: >=2 parallel steps keep both v7x TCs busy.
        half_rows = max(gran, (n_rows // 2) // gran * gran)
        tile_rows = min(target_rows, half_rows)
        grid = (pl.cdiv(n_rows, tile_rows),)

    # 2x double-buffered in + 2x out + (tiny) PE + slack; cap safely for v7x.
    tile_bytes = tile_rows * row_bytes
    vmem_limit = 4 * tile_bytes + 2 * 8 * row_bytes + (2 << 20)
    vmem_limit = int(min(max(vmem_limit, 16 << 20), 48 << 20))

    out2 = pl.pallas_call(
        pe_add_kernel,
        out_shape=jax.ShapeDtypeStruct((n_rows, W), x.dtype),
        grid=grid,
        in_specs=[
            pl.BlockSpec((tile_rows, W), lambda i: (i, 0)),  # row tile
            pl.BlockSpec((1, W), lambda i: (0, 0)),          # same PE row every step
        ],
        out_specs=pl.BlockSpec((tile_rows, W), lambda i: (i, 0)),
        input_output_aliases={0: 0},  # mirror PyTorch in-place `+=`
        compiler_params=pltpu.CompilerParams(
            dimension_semantics=("parallel",),
            vmem_limit_bytes=vmem_limit,
        ),
    )(x2, pe_tile)

    return out2.reshape(B, S, D)


# ---------------------------------------------------------------------------
# Demo / self-check
# ---------------------------------------------------------------------------
if __name__ == "__main__":
    max_length = 16
    d_model = 32
    batch = 2
    seq = 8  # must be < max_length (the module indexes PE[:, seq])

    pe = build_positional_embedding(max_length, d_model)

    key = jax.random.PRNGKey(0)
    x = jax.random.normal(key, (batch, seq, d_model), dtype=jnp.float32)

    # Pure-JAX reference of the exact PyTorch semantics, computed BEFORE the
    # kernel call because x is donated (its buffer is reused for the output).
    ref = x + pe[:, seq].astype(x.dtype)
    ref = jax.block_until_ready(ref)

    # Donate x so input_output_aliases={0: 0} doesn't force a defensive copy.
    fwd = jax.jit(positional_embedding_forward, donate_argnums=(0,))
    out = fwd(x, pe)
    out = jax.block_until_ready(out)

    assert out.shape == (batch, seq, d_model) and out.dtype == jnp.float32
    assert jnp.allclose(out, ref, atol=1e-6), "mismatch vs reference"

    print("KERNEL_OK")
</pallas_src>

<mosaic_0001>
module attributes {stable_mosaic.version = 11 : i64} {
  func.func @pe_add_kernel(%arg0: i32, %arg1: memref<4x128xf32, #tpu.memory_space<vmem>>, %arg2: memref<1x128xf32, #tpu.memory_space<vmem>>, %arg3: memref<4x128xf32, #tpu.memory_space<vmem>>) attributes {dimension_semantics = [#tpu.dimension_semantics<parallel>], iteration_bounds = array<i64: 1>, scalar_prefetch = 0 : i64, scratch_operands = 0 : i64, tpu.core_type = #tpu.core_type<tc>, window_params = [{transform_indices = @transform_0, window_bounds = array<i64: 4, 128>}, {pipeline_mode = #tpu.pipeline_mode<synchronous>, transform_indices = @transform_1, window_bounds = array<i64: 1, 128>}, {transform_indices = @transform_2, window_bounds = array<i64: 4, 128>}]} {
    %c0 = arith.constant 0 : index
    %c0_0 = arith.constant 0 : index
    %0 = vector.load %arg1[%c0, %c0_0] : memref<4x128xf32, #tpu.memory_space<vmem>>, vector<4x128xf32>
    %c0_1 = arith.constant 0 : index
    %c0_2 = arith.constant 0 : index
    %1 = vector.load %arg2[%c0_1, %c0_2] : memref<1x128xf32, #tpu.memory_space<vmem>>, vector<1x128xf32>
    %2 = vector.broadcast %1 : vector<1x128xf32> to vector<4x128xf32>
    %3 = arith.addf %0, %2 : vector<4x128xf32>
    %c0_3 = arith.constant 0 : index
    %c0_4 = arith.constant 0 : index
    %4 = vector.load %arg3[%c0_3, %c0_4] : memref<4x128xf32, #tpu.memory_space<vmem>>, vector<4x128xf32>
    tpu.vector_store %arg3[%c0_3, %c0_4], %3 {strides = array<i32>} : memref<4x128xf32, #tpu.memory_space<vmem>>, vector<4x128xf32>,
    return
  }
  func.func @transform_0(%arg0: i32) -> (i32, i32) {
    %c0_i32 = arith.constant 0 : i32
    %c0_i32_0 = arith.constant 0 : i32
    return %arg0, %c0_i32 : i32, i32
  }
  func.func @transform_1(%arg0: i32) -> (i32, i32) {
    %c0_i32 = arith.constant 0 : i32
    %c0_i32_0 = arith.constant 0 : i32
    %c0_i32_1 = arith.constant 0 : i32
    return %c0_i32, %c0_i32_0 : i32, i32
  }
  func.func @transform_2(%arg0: i32) -> (i32, i32) {
    %c0_i32 = arith.constant 0 : i32
    %c0_i32_0 = arith.constant 0 : i32
    return %arg0, %c0_i32 : i32, i32
  }
}

</mosaic_0001>

<llo_original>
// kernel: tile.7
$region0: #{tile.7}
  %s0 = inlined_call_operand.vmem [shape: f32[4,32], index: 0, kind: input, shape index: {}]
  %s1 = inlined_call_operand.vmem [shape: f32[1,128], index: 1, kind: output, shape index: {}]
  $region1: #{tile.7} parent=0
    #allocation0 [shape = 'u8[4096]{0}', space=vmem, size = 0x1000, scoped, tag = 'scoped mem for output reshape']
    #allocation1 [shape = 'u8[4096]{0}', space=vmem, size = 0x1000, scoped, tag = 'scoped mem for input reshape']
    %s3 = sshllo.u32 0, 4
    %v4 = vld [vmem:[%s0] sm:%s3]
    %5 = vst [vmem:[#allocation1] sm:%s3] %v4
    %v6 = vld [vmem:[#allocation1] sm:$0x1]
    %vm7 = vcmask 261120
    %8 = vst.msk [vmem:[#allocation0] sm:$0x1] %vm7, %v6
    %s9 = scalar_lea.vmem [#allocation1], 3
    %v10 = vld [vmem:[%s9] sm:$0x1]
    %11 = vrot.lane.b32.xlu0 %v10, 96
    %v12 = vpop.permute.xlu0 %11
    %vm13 = vcmask 1048320
    %14 = vst.msk [vmem:[#allocation0] sm:$0x1] %vm13, %v12
    %s15 = scalar_lea.vmem [#allocation1], 2
    %v16 = vld [vmem:[%s15] sm:$0x1]
    %17 = vrot.lane.b32.xlu0 %v16, 64
    %v18 = vpop.permute.xlu0 %17
    %vm19 = vcmask 785920
    %20 = vst.msk [vmem:[#allocation0] sm:$0x1] %vm19, %v18
    %s21 = scalar_lea.vmem [#allocation1], 1
    %v22 = vld [vmem:[%s21] sm:$0x1]
    %23 = vrot.lane.b32.xlu0 %v22, 32
    %v24 = vpop.permute.xlu0 %23
    %vm25 = vcmask 523520
    %26 = vst.msk [vmem:[#allocation0] sm:$0x1] %vm25, %v24
    %s28 = sshllo.u32 0, 1
    %v30 = vld [vmem:[#allocation0] sm:%s28]
    %s31 = sshllo.u32 0, 1
    %32 = vst [vmem:[%s1] sm:%s31] %v30

// kernel: tile.6
$region0: #{tile.6}
  #allocation0 [shape = 's32[1]{0}', space=sflag, size = 0x4, scoped, tag = 'scoped memory for tile.6']
  %s0 = inlined_call_operand.vmem [shape: f32[32], index: 0, kind: input, shape index: {}]
  %s1 = inlined_call_operand.vmem [shape: f32[4,32], index: 1, kind: output, shape index: {}]
  // Predicated region
  $region2: #{tile.6} parent=0 // pred_check
    _
  $region3: #{tile.6} parent=0 // pred_check_branch
    %3 = sbr.rel (0) target = $region5
  $region4: #{tile.6} parent=0 // pred_region
    _
  $region5: #{tile.6} parent=0 // pred_fallthru
    _
  %v4 = vld [vmem:[%s0] ss:$0 sm:$0xff]
  %5 = vst [vmem:[%s1] sm:$0xf] %v4

// kernel: positional_embedding_forward.1
$region0: #{positional_embedding_forward.1}
  #allocation0 [shape = 'u32[]', space=smem, size = 0x4, offset = 0x4, fixed_abs, tag = 'smem constant byte address 0x4 - core index']
  #allocation1 [shape = 'u32[144,128]{1,0:T(1,128)}', space=vmem, size = 0x12000, scoped, tag = 'internal scratch']
  %s0 = inlined_call_operand.vmem [shape: f32[4,128], index: 0, kind: input, shape index: {}, may-alias: {0,2}]
  %s1 = inlined_call_operand.vmem [shape: f32[1,128], index: 1, kind: input, shape index: {}]
  %s2 = inlined_call_operand.vmem [shape: f32[4,128], index: 2, kind: output, shape index: {}, may-alias: {0,2}]
  %s3 = sld [smem:[#allocation0]]
  $region18: #{positional_embedding_forward.1} parent=0
    _
  %s5 = ssub.s32 1, %s3
  %s6 = scalar_select 0, %s5, %s3
  // Predicated region
  $region2: #{positional_embedding_forward.1} parent=0 // pred_check
    _
  $region3: #{positional_embedding_forward.1} parent=0 // pred_check_branch
    %8 = sbr.rel (0) target = $region5
  $region4: #{positional_embedding_forward.1} parent=0 // pred_region
    _
  $region5: #{positional_embedding_forward.1} parent=0 // pred_fallthru
    _
  // Predicated region
  $region6: #{positional_embedding_forward.1} parent=0 // pred_check
    _
  $region7: #{positional_embedding_forward.1} parent=0 // pred_check_branch
    %10 = sbr.rel (0) target = $region9
  $region8: #{positional_embedding_forward.1} parent=0 // pred_region
    _
  $region9: #{positional_embedding_forward.1} parent=0 // pred_fallthru
    _
  %v11 = vld [vmem:[%s0] sm:$0xf]
  %v12 = vld [vmem:[%s1] sm:$0x1]
  %v14 = vlaneseq
  %v15 = vshrl.u32 %v14, 7
  %v16 = vsub.s32 0, %v15
  %v17 = vrot.slane %v12, %v16
  %v19 = vadd.f32 %v11, %v17
  %20 = vst [vmem:[%s2] sm:$0xf] %v19
  // Predicated region
  $region10: #{positional_embedding_forward.1} parent=0 // pred_check
    _
  $region11: #{positional_embedding_forward.1} parent=0 // pred_check_branch
    %22 = sbr.rel (0) target = $region13
  $region12: #{positional_embedding_forward.1} parent=0 // pred_region
    _
  $region13: #{positional_embedding_forward.1} parent=0 // pred_fallthru
    _
  // Predicated region
  $region14: #{positional_embedding_forward.1} parent=0 // pred_check
    _
  $region15: #{positional_embedding_forward.1} parent=0 // pred_check_branch
    %24 = sbr.rel (0) target = $region17
  $region16: #{positional_embedding_forward.1} parent=0 // pred_region
    _
  $region17: #{positional_embedding_forward.1} parent=0 // pred_fallthru
    _

</llo_original>
